<compile_context>
chip_gen: v7x
topology: tpu7x:2x2x1
jax: 0.10.0
libtpu: 0.0.40
codegen_flags: <defaults>
</compile_context>

<pallas_src>
import functools

import jax
import jax.numpy as jnp
from jax.experimental import pallas as pl
from jax.experimental.pallas import tpu as pltpu

OUT_PAD = 128  # lane-dense packed output width: [probs | value | zeros]


def actor_critic_kernel(x_ref, w1_ref, b1_ref, w2_ref, b2_ref, out_ref, *,
                        num_outputs):
    # ---- fused layer 1 (critic + actor hidden in one MXU pass) ----
    x = x_ref[...]                                               # (bb, in) f32
    h = jnp.dot(x, w1_ref[...], preferred_element_type=jnp.float32)
    h = jnp.maximum(h + b1_ref[...], 0.0)                        # (bb, 2H) f32

    # ---- fused layer 2 (logits + value in one MXU pass, 128-lane padded) ----
    raw = jnp.dot(h, w2_ref[...], preferred_element_type=jnp.float32)
    raw = raw + b2_ref[...]                                      # (bb, 128) f32
    # columns: [0, A) = actor logits, A = critic value, (A, 128) = padding

    col = jax.lax.broadcasted_iota(jnp.int32, raw.shape, 1)
    is_logit = col < num_outputs
    is_value = col == num_outputs

    # Numerically-stable softmax over logit columns only; padding + value
    # columns are masked so exp(.) underflows to exactly 0 in the denominator.
    masked = jnp.where(is_logit, raw, jnp.float32(-1e30))
    m = jnp.max(masked, axis=1, keepdims=True)
    e = jnp.exp(masked - m)
    denom = jnp.sum(e, axis=1, keepdims=True)
    probs = e * (1.0 / denom)                    # exact normalization

    # Packed lane-dense store: probs in logit cols, raw value in col A, 0 else.
    out = jnp.where(is_logit, probs, jnp.where(is_value, raw, 0.0))
    out_ref[...] = out.astype(out_ref.dtype)


def fuse_params(params, num_outputs, *, out_pad=OUT_PAD):
    """Host-side fusion of the two heads' weights into lane-dense f32 matrices."""
    H = params["wc1"].shape[1]
    A = num_outputs
    assert A + 1 <= out_pad

    # Layer 1: columns [0, H) = critic hidden, [H, 2H) = actor hidden.
    w1 = jnp.concatenate([params["wc1"], params["wa1"]], axis=1)   # (in, 2H)
    b1 = jnp.concatenate([params["bc1"], params["ba1"]], axis=1)   # (1, 2H)

    # Layer 2: block-structured, zero-padded to `out_pad` lanes.
    w2 = jnp.zeros((2 * H, out_pad), jnp.float32)
    w2 = w2.at[H:, :A].set(params["wa2"])          # actor hidden -> logits
    w2 = w2.at[:H, A].set(params["wc2"][:, 0])     # critic hidden -> value
    b2 = jnp.zeros((1, out_pad), jnp.float32)
    b2 = b2.at[:, :A].set(params["ba2"])
    b2 = b2.at[:, A].set(params["bc2"][:, 0])

    return dict(w1=w1, b1=b1, w2=w2, b2=b2)


def _vmem_budget_bytes(bb, num_inputs, fused, out_pad):
    """Rough scoped-VMEM footprint: resident weights + double-buffered tiles +
    f32 intermediates (h, raw/masked/e/probs)."""
    f32 = 4
    two_h = fused["w1"].shape[1]
    weights = sum(int(v.size) for v in fused.values()) * f32
    tiles = 2 * (bb * num_inputs + bb * out_pad) * f32      # in/out double-buffer
    interm = bb * (two_h + 4 * out_pad) * f32
    return weights + tiles + interm


def actor_critic_forward(x, fused, num_outputs, *, batch_block=None):
    """Fused ActorCritic forward. Returns (probs, value).

    batch_block: optional batch tile (multiple of 8, divides B). Leave None at
    small/medium B (single block, fewest grid steps — best on single-TC
    v5e/v6e). For training-scale B on v7x pick bb <= B/2 so grid >= 2 and the
    'parallel' axis shards across both TensorCores.
    """
    B, num_inputs = x.shape
    out_pad = fused["w2"].shape[1]

    bb = B if batch_block is None else batch_block
    assert B % bb == 0 and (bb == B or bb % 8 == 0)

    const = lambda arr: pl.BlockSpec(arr.shape, lambda i: (0, 0))  # VMEM-resident

    # Only raise the scoped-VMEM limit when the footprint actually needs it
    # (v5e default scoped limit is 16 MiB; v7x physical VMEM is 64 MiB/TC).
    budget = int(1.5 * _vmem_budget_bytes(bb, num_inputs, fused, out_pad))
    vmem_limit = budget if budget > (16 << 20) else None

    out = pl.pallas_call(
        functools.partial(actor_critic_kernel, num_outputs=num_outputs),
        out_shape=jax.ShapeDtypeStruct((B, out_pad), jnp.float32),
        grid_spec=pltpu.PrefetchScalarGridSpec(
            num_scalar_prefetch=0,
            grid=(B // bb,),
            in_specs=[
                pl.BlockSpec((bb, num_inputs), lambda i: (i, 0)),   # x tile
                const(fused["w1"]),                                 # weights stay
                const(fused["b1"]),                                 # resident
                const(fused["w2"]),
                const(fused["b2"]),
            ],
            out_specs=pl.BlockSpec((bb, out_pad), lambda i: (i, 0)),
        ),
        compiler_params=pltpu.CompilerParams(
            dimension_semantics=("parallel",),
            vmem_limit_bytes=vmem_limit),
    )(x, fused["w1"], fused["b1"], fused["w2"], fused["b2"])

    probs = out[:, :num_outputs]
    value = out[:, num_outputs:num_outputs + 1]
    return probs, value


def init_params(key, num_inputs, num_outputs, hidden_size):
    """Deterministic synthetic init; weights stored as (in, out) (PyTorch^T)."""
    ks = jax.random.split(key, 8)

    def lin(kw, kb, fan_in, fan_out):
        bound = 1.0 / jnp.sqrt(jnp.float32(fan_in))
        w = jax.random.uniform(kw, (fan_in, fan_out), jnp.float32, -bound, bound)
        b = jax.random.uniform(kb, (1, fan_out), jnp.float32, -bound, bound)
        return w, b

    wc1, bc1 = lin(ks[0], ks[1], num_inputs, hidden_size)
    wc2, bc2 = lin(ks[2], ks[3], hidden_size, 1)
    wa1, ba1 = lin(ks[4], ks[5], num_inputs, hidden_size)
    wa2, ba2 = lin(ks[6], ks[7], hidden_size, num_outputs)
    return dict(wc1=wc1, bc1=bc1, wc2=wc2, bc2=bc2,
                wa1=wa1, ba1=ba1, wa2=wa2, ba2=ba2)


if __name__ == "__main__":
    # Small shapes consistent with the module (CartPole-like env):
    B = 8             # batch (num parallel envs)
    NUM_INPUTS = 4    # observation_space.shape[0]
    NUM_OUTPUTS = 2   # action_space.n
    HIDDEN = 256      # hidden_size from the module (lane-full multiple of 128)

    key = jax.random.PRNGKey(0)
    kx, kp = jax.random.split(key)
    x = jax.random.normal(kx, (B, NUM_INPUTS), jnp.float32)
    params = init_params(kp, NUM_INPUTS, NUM_OUTPUTS, HIDDEN)
    fused = fuse_params(params, NUM_OUTPUTS)

    probs, value = actor_critic_forward(x, fused, NUM_OUTPUTS)
    jax.block_until_ready((probs, value))

    # Plain-f32 JAX reference, per-head un-fused (matches the PyTorch module).
    hc = jnp.maximum(x @ params["wc1"] + params["bc1"], 0.0)
    v_ref = hc @ params["wc2"] + params["bc2"]
    ha = jnp.maximum(x @ params["wa1"] + params["ba1"], 0.0)
    p_ref = jax.nn.softmax(ha @ params["wa2"] + params["ba2"], axis=1)

    assert probs.shape == (B, NUM_OUTPUTS) and value.shape == (B, 1)
    assert jnp.allclose(probs, p_ref, atol=1e-3, rtol=1e-3), "probs mismatch"
    assert jnp.allclose(value, v_ref, atol=1e-3, rtol=1e-3), "value mismatch"
    assert jnp.allclose(jnp.sum(probs, axis=1), 1.0, atol=1e-4), "probs not normalized"

    print("KERNEL_OK")
</pallas_src>

<mosaic_0001>
module attributes {stable_mosaic.version = 11 : i64} {
  func.func @actor_critic_kernel(%arg0: i32, %arg1: memref<8x4xf32, #tpu.memory_space<vmem>>, %arg2: memref<4x512xf32, #tpu.memory_space<vmem>>, %arg3: memref<1x512xf32, #tpu.memory_space<vmem>>, %arg4: memref<512x128xf32, #tpu.memory_space<vmem>>, %arg5: memref<1x128xf32, #tpu.memory_space<vmem>>, %arg6: memref<8x128xf32, #tpu.memory_space<vmem>>) attributes {dimension_semantics = [#tpu.dimension_semantics<parallel>], iteration_bounds = array<i64: 1>, scalar_prefetch = 0 : i64, scratch_operands = 0 : i64, tpu.core_type = #tpu.core_type<tc>, window_params = [{transform_indices = @transform_0, window_bounds = array<i64: 8, 4>}, {pipeline_mode = #tpu.pipeline_mode<synchronous>, transform_indices = @transform_1, window_bounds = array<i64: 4, 512>}, {pipeline_mode = #tpu.pipeline_mode<synchronous>, transform_indices = @transform_2, window_bounds = array<i64: 1, 512>}, {pipeline_mode = #tpu.pipeline_mode<synchronous>, transform_indices = @transform_3, window_bounds = array<i64: 512, 128>}, {pipeline_mode = #tpu.pipeline_mode<synchronous>, transform_indices = @transform_4, window_bounds = array<i64: 1, 128>}, {transform_indices = @transform_5, window_bounds = array<i64: 8, 128>}]} {
    %c0 = arith.constant 0 : index
    %c0_0 = arith.constant 0 : index
    %0 = vector.load %arg1[%c0, %c0_0] : memref<8x4xf32, #tpu.memory_space<vmem>>, vector<8x4xf32>
    %c0_1 = arith.constant 0 : index
    %c0_2 = arith.constant 0 : index
    %1 = vector.load %arg2[%c0_1, %c0_2] : memref<4x512xf32, #tpu.memory_space<vmem>>, vector<4x512xf32>
    %cst = arith.constant dense<0.000000e+00> : vector<8x512xf32>
    %2 = tpu.matmul %0, %1, %cst {dimension_numbers = #tpu.dot_dimension_numbers<[1], [0], [0], [1], [0, 0, 1, 1], [], []>} : vector<8x4xf32>, vector<4x512xf32>, vector<8x512xf32> -> vector<8x512xf32>
    %c0_3 = arith.constant 0 : index
    %c0_4 = arith.constant 0 : index
    %3 = vector.load %arg3[%c0_3, %c0_4] : memref<1x512xf32, #tpu.memory_space<vmem>>, vector<1x512xf32>
    %4 = vector.broadcast %3 : vector<1x512xf32> to vector<8x512xf32>
    %5 = arith.addf %2, %4 : vector<8x512xf32>
    %cst_5 = arith.constant 0.000000e+00 : f32
    %6 = vector.broadcast %cst_5 : f32 to vector<8x512xf32>
    %7 = arith.maximumf %5, %6 : vector<8x512xf32>
    %c0_6 = arith.constant 0 : index
    %c0_7 = arith.constant 0 : index
    %8 = vector.load %arg4[%c0_6, %c0_7] : memref<512x128xf32, #tpu.memory_space<vmem>>, vector<512x128xf32>
    %cst_8 = arith.constant dense<0.000000e+00> : vector<8x128xf32>
    %9 = tpu.matmul %7, %8, %cst_8 {dimension_numbers = #tpu.dot_dimension_numbers<[1], [0], [0], [1], [0, 0, 1, 1], [], []>} : vector<8x512xf32>, vector<512x128xf32>, vector<8x128xf32> -> vector<8x128xf32>
    %c0_9 = arith.constant 0 : index
    %c0_10 = arith.constant 0 : index
    %10 = vector.load %arg5[%c0_9, %c0_10] : memref<1x128xf32, #tpu.memory_space<vmem>>, vector<1x128xf32>
    %11 = vector.broadcast %10 : vector<1x128xf32> to vector<8x128xf32>
    %12 = arith.addf %9, %11 : vector<8x128xf32>
    %13 = tpu.iota {dimensions = array<i32: 1>} : vector<8x128xi32>
    %c2_i32 = arith.constant 2 : i32
    %14 = vector.broadcast %c2_i32 : i32 to vector<8x128xi32>
    %15 = arith.cmpi slt, %13, %14 : vector<8x128xi32>
    %c2_i32_11 = arith.constant 2 : i32
    %16 = vector.broadcast %c2_i32_11 : i32 to vector<8x128xi32>
    %17 = arith.cmpi eq, %13, %16 : vector<8x128xi32>
    %cst_12 = arith.constant -1.000000e+30 : f32
    %18 = vector.broadcast %cst_12 : f32 to vector<8x128xf32>
    %19 = arith.select %15, %12, %18 : vector<8x128xi1>, vector<8x128xf32>
    %cst_13 = arith.constant dense<0xFF800000> : vector<8xf32>
    %20 = vector.multi_reduction <maximumf>, %19, %cst_13 [1] : vector<8x128xf32> to vector<8xf32>
    %21 = vector.shape_cast %20 : vector<8xf32> to vector<8x1xf32>
    %22 = vector.broadcast %21 : vector<8x1xf32> to vector<8x128xf32>
    %23 = arith.subf %19, %22 : vector<8x128xf32>
    %24 = math.exp %23 : vector<8x128xf32>
    %cst_14 = arith.constant dense<0.000000e+00> : vector<8xf32>
    %25 = vector.multi_reduction <add>, %24, %cst_14 [1] : vector<8x128xf32> to vector<8xf32>
    %26 = vector.shape_cast %25 : vector<8xf32> to vector<8x1xf32>
    %cst_15 = arith.constant 1.000000e+00 : f32
    %27 = vector.broadcast %cst_15 : f32 to vector<8x1xf32>
    %28 = arith.divf %27, %26 : vector<8x1xf32>
    %29 = vector.broadcast %28 : vector<8x1xf32> to vector<8x128xf32>
    %30 = arith.mulf %24, %29 : vector<8x128xf32>
    %cst_16 = arith.constant 0.000000e+00 : f32
    %31 = vector.broadcast %cst_16 : f32 to vector<8x128xf32>
    %32 = arith.select %17, %12, %31 : vector<8x128xi1>, vector<8x128xf32>
    %33 = arith.select %15, %30, %32 : vector<8x128xi1>, vector<8x128xf32>
    %c0_17 = arith.constant 0 : index
    %c0_18 = arith.constant 0 : index
    %34 = vector.load %arg6[%c0_17, %c0_18] : memref<8x128xf32, #tpu.memory_space<vmem>>, vector<8x128xf32>
    tpu.vector_store %arg6[%c0_17, %c0_18], %33 {strides = array<i32>} : memref<8x128xf32, #tpu.memory_space<vmem>>, vector<8x128xf32>,
    return
  }
  func.func @transform_0(%arg0: i32) -> (i32, i32) {
    %c0_i32 = arith.constant 0 : i32
    %c0_i32_0 = arith.constant 0 : i32
    return %arg0, %c0_i32 : i32, i32
  }
  func.func @transform_1(%arg0: i32) -> (i32, i32) {
    %c0_i32 = arith.constant 0 : i32
    %c0_i32_0 = arith.constant 0 : i32
    %c0_i32_1 = arith.constant 0 : i32
    return %c0_i32, %c0_i32_0 : i32, i32
  }
  func.func @transform_2(%arg0: i32) -> (i32, i32) {
    %c0_i32 = arith.constant 0 : i32
    %c0_i32_0 = arith.constant 0 : i32
    %c0_i32_1 = arith.constant 0 : i32
    return %c0_i32, %c0_i32_0 : i32, i32
  }
  func.func @transform_3(%arg0: i32) -> (i32, i32) {
    %c0_i32 = arith.constant 0 : i32
    %c0_i32_0 = arith.constant 0 : i32
    %c0_i32_1 = arith.constant 0 : i32
    return %c0_i32, %c0_i32_0 : i32, i32
  }
  func.func @transform_4(%arg0: i32) -> (i32, i32) {
    %c0_i32 = arith.constant 0 : i32
    %c0_i32_0 = arith.constant 0 : i32
    %c0_i32_1 = arith.constant 0 : i32
    return %c0_i32, %c0_i32_0 : i32, i32
  }
  func.func @transform_5(%arg0: i32) -> (i32, i32) {
    %c0_i32 = arith.constant 0 : i32
    %c0_i32_0 = arith.constant 0 : i32
    return %arg0, %c0_i32 : i32, i32
  }
}

</mosaic_0001>

<llo_original>
// kernel: tpu_custom_call.1
$region0: #{tpu_custom_call.1}
  #allocation0 [shape = 'u32[]', space=smem, size = 0x4, offset = 0x4, fixed_abs, tag = 'smem constant byte address 0x4 - core index']
  #allocation1 [shape = 'u32[144,128]{1,0:T(1,128)}', space=vmem, size = 0x12000, scoped, tag = 'internal scratch']
  %s0 = inlined_call_operand.vmem [shape: f32[8,4], index: 0, kind: input, shape index: {}]
  %s1 = inlined_call_operand.hbm [shape: f32[4,512], index: 1, kind: input, shape index: {}]
  %s2 = inlined_call_operand.vmem [shape: f32[1,512], index: 2, kind: input, shape index: {}]
  %s3 = inlined_call_operand.hbm [shape: f32[512,128], index: 3, kind: input, shape index: {}]
  %s4 = inlined_call_operand.vmem [shape: f32[1,128], index: 4, kind: input, shape index: {}]
  %s5 = inlined_call_operand.hbm [shape: f32[8,128], index: 5, kind: output, shape index: {}]
  %s6 = sld [smem:[#allocation0]]
  $region38: #{tpu_custom_call.1} parent=0
    _
  %s8 = ssub.s32 1, %s6
  %s9 = scalar_select 0, %s8, %s6
  $region1: #{tpu_custom_call.1} parent=0
    #allocation2 [shape = 'u8[8192]{0}', space=vmem, size = 0x2000, scoped, tag = 'input window, operand 1, single buffered']
    #allocation3 [shape = 's32[1]{0}', space=sflag, size = 0x4, scoped, tag = 'scoped memory for tpu_custom_call.1']
    #allocation4 [shape = 's32[1]{0}', space=sflag, size = 0x4, scoped, tag = 'scoped memory for tpu_custom_call.1']
    #allocation5 [shape = 'u8[262144]{0}', space=vmem, size = 0x40000, scoped, tag = 'input window, operand 3, single buffered']
    #allocation6 [shape = 's32[1]{0}', space=sflag, size = 0x4, scoped, tag = 'scoped memory for tpu_custom_call.1']
    #allocation7 [shape = 'u8[4096]{0}', space=vmem, size = 0x1000, scoped, tag = 'output window, operand 0, single buffered']
    %10 = vsyncpa [#allocation3], 0
    %11 = vsyncpa [#allocation6], 0
    %12 = vsyncpa [#allocation4], 0
    // Predicated region
    $region2: #{tpu_custom_call.1} parent=1 // pred_check
      _
    $region3: #{tpu_custom_call.1} parent=1 // pred_check_branch
      %14 = sbr.rel (0) target = $region5
    $region4: #{tpu_custom_call.1} parent=1 // pred_region
      _
    $region5: #{tpu_custom_call.1} parent=1 // pred_fallthru
      _
    // Predicated region
    $region6: #{tpu_custom_call.1} parent=1 // pred_check
      _
    $region7: #{tpu_custom_call.1} parent=1 // pred_check_branch
      %16 = sbr.rel (0) target = $region9
    $region8: #{tpu_custom_call.1} parent=1 // pred_region
      %s18 = ssub.s32 256, 256
      %19 = vsyncadd [#allocation3], %s18
      %s21 = sshll.u32 [#allocation2], 4
      %s22 = int_to_ptr.vmem [resolvable:$true] %s21
      %24 = dma.hbm_to_vmem [thread:$0]  %s1, 256, %s22, [#allocation3]
    $region9: #{tpu_custom_call.1} parent=1 // pred_fallthru
      _
    // Predicated region
    $region10: #{tpu_custom_call.1} parent=1 // pred_check
      _
    $region11: #{tpu_custom_call.1} parent=1 // pred_check_branch
      %26 = sbr.rel (0) target = $region13
    $region12: #{tpu_custom_call.1} parent=1 // pred_region
      _
    $region13: #{tpu_custom_call.1} parent=1 // pred_fallthru
      _
    // Predicated region
    $region14: #{tpu_custom_call.1} parent=1 // pred_check
      _
    $region15: #{tpu_custom_call.1} parent=1 // pred_check_branch
      %28 = sbr.rel (0) target = $region17
    $region16: #{tpu_custom_call.1} parent=1 // pred_region
      %s30 = ssub.s32 8192, 8192
      %31 = vsyncadd [#allocation6], %s30
      %s32 = sshll.u32 [#allocation5], 4
      %s33 = int_to_ptr.vmem [resolvable:$true] %s32
      %38 = dma.hbm_to_vmem [thread:$0]  %s3, 8192, %s33, [#allocation6], 128, 128, 8
    $region17: #{tpu_custom_call.1} parent=1 // pred_fallthru
      _
    // Predicated region
    $region18: #{tpu_custom_call.1} parent=1 // pred_check
      _
    $region19: #{tpu_custom_call.1} parent=1 // pred_check_branch
      %40 = sbr.rel (0) target = $region21
    $region20: #{tpu_custom_call.1} parent=1 // pred_region
      _
    $region21: #{tpu_custom_call.1} parent=1 // pred_fallthru
      _
    // Predicated region
    $region22: #{tpu_custom_call.1} parent=1 // pred_check
      _
    $region23: #{tpu_custom_call.1} parent=1 // pred_check_branch
      %42 = sbr.rel (0) target = $region25
    $region24: #{tpu_custom_call.1} parent=1 // pred_region
      %43 = dma.done [#allocation3], 256
    $region25: #{tpu_custom_call.1} parent=1 // pred_fallthru
      _
    // Predicated region
    $region26: #{tpu_custom_call.1} parent=1 // pred_check
      _
    $region27: #{tpu_custom_call.1} parent=1 // pred_check_branch
      %45 = sbr.rel (0) target = $region29
    $region28: #{tpu_custom_call.1} parent=1 // pred_region
      %46 = dma.done [#allocation6], 8192
    $region29: #{tpu_custom_call.1} parent=1 // pred_fallthru
      _
    %v47 = vld [vmem:[%s0] sm:$0xff]
    %v48 = vld [vmem:[#allocation2] sm:$0xff]
    %v49 = vld [vmem:[#allocation2 + $0x8] sm:$0xff]
    %v50 = vld [vmem:[%s2] sm:$0xf]
    %v52 = vlaneseq
    %v53 = vshrl.u32 %v52, 7
    %v54 = vsub.s32 0, %v53
    %v55 = vrot.slane %v50, %v54
    %v56 = vlaneseq
    %v57 = vshrl.u32 %v56, 7
    %v58 = vsub.s32 1, %v57
    %v59 = vrot.slane %v50, %v58
    %v60 = vlaneseq
    %v61 = vshrl.u32 %v60, 7
    %v62 = vsub.s32 2, %v61
    %v63 = vrot.slane %v50, %v62
    %v64 = vlaneseq
    %v65 = vshrl.u32 %v64, 7
    %v66 = vsub.s32 3, %v65
    %v67 = vrot.slane %v50, %v66
    %v74 = vcombine.high %v48, %v48
    %v75 = vcombine.high %v49, %v49
    %vm76 = vcmask 31744
    %v78 = vsel %vm76, %v47, 0
    %vm80 = vcmask 1043456
    %v81 = vsel %vm80, %v48, 0
    %v83 = vsel %vm80, %v74, 0
    %v85 = vsel %vm80, %v49, 0
    %v87 = vsel %vm80, %v75, 0
    %89 = vmatprep.subr.mxu0 %v83
    %90 = vmatpush1.msra.mxu0 %v81
    %91 = vmatprep.subr.mxu0 0.0
    %92 = vmatpush1.msra.mxu0 0.0
    %93 = vmatprep.subr.mxu0 0.0
    %94 = vmatpush1.msra.mxu0 0.0
    %95 = vmatprep.subr.mxu0 0.0
    %96 = vmatpush1.msra.mxu0 0.0
    %97 = vmatprep.subr.mxu0 0.0
    %98 = vmatpush1.msra.mxu0 0.0
    %99 = vmatprep.subr.mxu0 0.0
    %100 = vmatpush1.msra.mxu0 0.0
    %101 = vmatprep.subr.mxu0 0.0
    %102 = vmatpush1.msra.mxu0 0.0
    %103 = vmatprep.subr.mxu0 0.0
    %104 = vmatpush1.msra.mxu0 0.0
    %105 = vmatprep.subr.mxu0 0.0
    %106 = vmatpush1.msra.mxu0 0.0
    %107 = vmatprep.subr.mxu0 0.0
    %108 = vmatpush1.msra.mxu0 0.0
    %109 = vmatprep.subr.mxu0 0.0
    %110 = vmatpush1.msra.mxu0 0.0
    %111 = vmatprep.subr.mxu0 0.0
    %112 = vmatpush1.msra.mxu0 0.0
    %113 = vmatprep.subr.mxu0 0.0
    %114 = vmatpush1.msra.mxu0 0.0
    %115 = vmatprep.subr.mxu0 0.0
    %116 = vmatpush1.msra.mxu0 0.0
    %117 = vmatprep.subr.mxu0 0.0
    %118 = vmatpush1.msra.mxu0 0.0
    %119 = vmatprep.subr.mxu0 0.0
    %120 = vmatpush1.msra.mxu0 0.0
    %121 = vmatprep.subr.mxu0 0.0
    %122 = vmatpush1.msra.mxu0 0.0
    %123 = vmatprep.subr.mxu0 0.0
    %124 = vmatpush1.msra.mxu0 0.0
    %125 = vmatprep.subr.mxu0 0.0
    %126 = vmatpush1.msra.mxu0 0.0
    %127 = vmatprep.subr.mxu0 0.0
    %128 = vmatpush1.msra.mxu0 0.0
    %129 = vmatprep.subr.mxu0 0.0
    %130 = vmatpush1.msra.mxu0 0.0
    %131 = vmatprep.subr.mxu0 0.0
    %132 = vmatpush1.msra.mxu0 0.0
    %133 = vmatprep.subr.mxu0 0.0
    %134 = vmatpush1.msra.mxu0 0.0
    %135 = vmatprep.subr.mxu0 0.0
    %136 = vmatpush1.msra.mxu0 0.0
    %137 = vmatprep.subr.mxu0 0.0
    %138 = vmatpush1.msra.mxu0 0.0
    %139 = vmatprep.subr.mxu0 0.0
    %140 = vmatpush1.msra.mxu0 0.0
    %141 = vmatprep.subr.mxu0 0.0
    %142 = vmatpush1.msra.mxu0 0.0
    %143 = vmatprep.subr.mxu0 0.0
    %144 = vmatpush1.msra.mxu0 0.0
    %145 = vmatprep.subr.mxu0 0.0
    %146 = vmatpush1.msra.mxu0 0.0
    %147 = vmatprep.subr.mxu0 0.0
    %148 = vmatpush1.msra.mxu0 0.0
    %149 = vmatprep.subr.mxu0 0.0
    %150 = vmatpush1.msra.mxu0 0.0
    %151 = vmatprep.subr.mxu0 0.0
    %152 = vmatpush1.msra.mxu0 0.0
    %153 = vmatprep.mubr.f32.mxu0 0.0
    %154 = vmatmul.mubr.f32.gmra.mrb[0].mxu0 %v78
    %v155 = vpop.f32.mrb[0].mxu0
    %v156 = vadd.f32 %v55, %v155
    %v157 = vpop.f32.mrb[0].mxu0
    %v158 = vadd.f32 %v59, %v157
    %159 = vdwg.mxu0
    %160 = vmatprep.subr.mxu0 %v87
    %161 = vmatpush1.msra.mxu0 %v85
    %162 = vmatprep.subr.mxu0 0.0
    %163 = vmatpush1.msra.mxu0 0.0
    %164 = vmatprep.subr.mxu0 0.0
    %165 = vmatpush1.msra.mxu0 0.0
    %166 = vmatprep.subr.mxu0 0.0
    %167 = vmatpush1.msra.mxu0 0.0
    %168 = vmatprep.subr.mxu0 0.0
    %169 = vmatpush1.msra.mxu0 0.0
    %170 = vmatprep.subr.mxu0 0.0
    %171 = vmatpush1.msra.mxu0 0.0
    %172 = vmatprep.subr.mxu0 0.0
    %173 = vmatpush1.msra.mxu0 0.0
    %174 = vmatprep.subr.mxu0 0.0
    %175 = vmatpush1.msra.mxu0 0.0
    %176 = vmatprep.subr.mxu0 0.0
    %177 = vmatpush1.msra.mxu0 0.0
    %178 = vmatprep.subr.mxu0 0.0
    %179 = vmatpush1.msra.mxu0 0.0
    %180 = vmatprep.subr.mxu0 0.0
    %181 = vmatpush1.msra.mxu0 0.0
    %182 = vmatprep.subr.mxu0 0.0
    %183 = vmatpush1.msra.mxu0 0.0
    %184 = vmatprep.subr.mxu0 0.0
    %185 = vmatpush1.msra.mxu0 0.0
    %186 = vmatprep.subr.mxu0 0.0
    %187 = vmatpush1.msra.mxu0 0.0
    %188 = vmatprep.subr.mxu0 0.0
    %189 = vmatpush1.msra.mxu0 0.0
    %190 = vmatprep.subr.mxu0 0.0
    %191 = vmatpush1.msra.mxu0 0.0
    %192 = vmatprep.subr.mxu0 0.0
    %193 = vmatpush1.msra.mxu0 0.0
    %194 = vmatprep.subr.mxu0 0.0
    %195 = vmatpush1.msra.mxu0 0.0
    %196 = vmatprep.subr.mxu0 0.0
    %197 = vmatpush1.msra.mxu0 0.0
    %198 = vmatprep.subr.mxu0 0.0
    %199 = vmatpush1.msra.mxu0 0.0
    %200 = vmatprep.subr.mxu0 0.0
    %201 = vmatpush1.msra.mxu0 0.0
    %202 = vmatprep.subr.mxu0 0.0
    %203 = vmatpush1.msra.mxu0 0.0
    %204 = vmatprep.subr.mxu0 0.0
    %205 = vmatpush1.msra.mxu0 0.0
    %206 = vmatprep.subr.mxu0 0.0
    %207 = vmatpush1.msra.mxu0 0.0
    %208 = vmatprep.subr.mxu0 0.0
    %209 = vmatpush1.msra.mxu0 0.0
    %210 = vmatprep.subr.mxu0 0.0
    %211 = vmatpush1.msra.mxu0 0.0
    %212 = vmatprep.subr.mxu0 0.0
    %213 = vmatpush1.msra.mxu0 0.0
    %214 = vmatprep.subr.mxu0 0.0
    %215 = vmatpush1.msra.mxu0 0.0
    %216 = vmatprep.subr.mxu0 0.0
    %217 = vmatpush1.msra.mxu0 0.0
    %218 = vmatprep.subr.mxu0 0.0
    %219 = vmatpush1.msra.mxu0 0.0
    %220 = vmatprep.subr.mxu0 0.0
    %221 = vmatpush1.msra.mxu0 0.0
    %222 = vmatprep.subr.mxu0 0.0
    %223 = vmatpush1.msra.mxu0 0.0
    %224 = vmatprep.mubr.f32.mxu0 0.0
    %225 = vmatmul.mubr.f32.gmra.mrb[0].mxu0 %v78
    %v226 = vpop.f32.mrb[0].mxu0
    %v227 = vadd.f32 %v63, %v226
    %v228 = vpop.f32.mrb[0].mxu0
    %v229 = vadd.f32 %v67, %v228
    %230 = vdwg.mxu0
    %v231 = vmax.f32 %v156, 0.0
    %v232 = vmax.f32 %v158, 0.0
    %v233 = vmax.f32 %v227, 0.0
    %v234 = vmax.f32 %v229, 0.0
    %v235 = vld [vmem:[#allocation5] sm:$0xff]
    %v236 = vld [vmem:[#allocation5 + $0x8] sm:$0xff]
    %v237 = vld [vmem:[#allocation5 + $0x10] sm:$0xff]
    %v238 = vld [vmem:[#allocation5 + $0x18] sm:$0xff]
    %v239 = vld [vmem:[#allocation5 + $0x20] sm:$0xff]
    %v240 = vld [vmem:[#allocation5 + $0x28] sm:$0xff]
    %v241 = vld [vmem:[#allocation5 + $0x30] sm:$0xff]
    %v242 = vld [vmem:[#allocation5 + $0x38] sm:$0xff]
    %v243 = vld [vmem:[#allocation5 + $0x40] sm:$0xff]
    %v244 = vld [vmem:[#allocation5 + $0x48] sm:$0xff]
    %v245 = vld [vmem:[#allocation5 + $0x50] sm:$0xff]
    %v246 = vld [vmem:[#allocation5 + $0x58] sm:$0xff]
    %v247 = vld [vmem:[#allocation5 + $0x60] sm:$0xff]
    %v248 = vld [vmem:[#allocation5 + $0x68] sm:$0xff]
    %v249 = vld [vmem:[#allocation5 + $0x70] sm:$0xff]
    %v250 = vld [vmem:[#allocation5 + $0x78] sm:$0xff]
    %v251 = vld [vmem:[#allocation5 + $0x80] sm:$0xff]
    %v252 = vld [vmem:[#allocation5 + $0x88] sm:$0xff]
    %v253 = vld [vmem:[#allocation5 + $0x90] sm:$0xff]
    %v254 = vld [vmem:[#allocation5 + $0x98] sm:$0xff]
    %v255 = vld [vmem:[#allocation5 + $0xa0] sm:$0xff]
    %v256 = vld [vmem:[#allocation5 + $0xa8] sm:$0xff]
    %v257 = vld [vmem:[#allocation5 + $0xb0] sm:$0xff]
    %v258 = vld [vmem:[#allocation5 + $0xb8] sm:$0xff]
    %v259 = vld [vmem:[#allocation5 + $0xc0] sm:$0xff]
    %v260 = vld [vmem:[#allocation5 + $0xc8] sm:$0xff]
    %v261 = vld [vmem:[#allocation5 + $0xd0] sm:$0xff]
    %v262 = vld [vmem:[#allocation5 + $0xd8] sm:$0xff]
    %v263 = vld [vmem:[#allocation5 + $0xe0] sm:$0xff]
    %v264 = vld [vmem:[#allocation5 + $0xe8] sm:$0xff]
    %v265 = vld [vmem:[#allocation5 + $0xf0] sm:$0xff]
    %v266 = vld [vmem:[#allocation5 + $0xf8] sm:$0xff]
    %v267 = vld [vmem:[#allocation5 + $0x100] sm:$0xff]
    %v268 = vld [vmem:[#allocation5 + $0x108] sm:$0xff]
    %v269 = vld [vmem:[#allocation5 + $0x110] sm:$0xff]
    %v270 = vld [vmem:[#allocation5 + $0x118] sm:$0xff]
    %v271 = vld [vmem:[#allocation5 + $0x120] sm:$0xff]
    %v272 = vld [vmem:[#allocation5 + $0x128] sm:$0xff]
    %v273 = vld [vmem:[#allocation5 + $0x130] sm:$0xff]
    %v274 = vld [vmem:[#allocation5 + $0x138] sm:$0xff]
    %v275 = vld [vmem:[#allocation5 + $0x140] sm:$0xff]
    %v276 = vld [vmem:[#allocation5 + $0x148] sm:$0xff]
    %v277 = vld [vmem:[#allocation5 + $0x150] sm:$0xff]
    %v278 = vld [vmem:[#allocation5 + $0x158] sm:$0xff]
    %v279 = vld [vmem:[#allocation5 + $0x160] sm:$0xff]
    %v280 = vld [vmem:[#allocation5 + $0x168] sm:$0xff]
    %v281 = vld [vmem:[#allocation5 + $0x170] sm:$0xff]
    %v282 = vld [vmem:[#allocation5 + $0x178] sm:$0xff]
    %v283 = vld [vmem:[#allocation5 + $0x180] sm:$0xff]
    %v284 = vld [vmem:[#allocation5 + $0x188] sm:$0xff]
    %v285 = vld [vmem:[#allocation5 + $0x190] sm:$0xff]
    %v286 = vld [vmem:[#allocation5 + $0x198] sm:$0xff]
    %v287 = vld [vmem:[#allocation5 + $0x1a0] sm:$0xff]
    %v288 = vld [vmem:[#allocation5 + $0x1a8] sm:$0xff]
    %v289 = vld [vmem:[#allocation5 + $0x1b0] sm:$0xff]
    %v290 = vld [vmem:[#allocation5 + $0x1b8] sm:$0xff]
    %v291 = vld [vmem:[#allocation5 + $0x1c0] sm:$0xff]
    %v292 = vld [vmem:[#allocation5 + $0x1c8] sm:$0xff]
    %v293 = vld [vmem:[#allocation5 + $0x1d0] sm:$0xff]
    %v294 = vld [vmem:[#allocation5 + $0x1d8] sm:$0xff]
    %v295 = vld [vmem:[#allocation5 + $0x1e0] sm:$0xff]
    %v296 = vld [vmem:[#allocation5 + $0x1e8] sm:$0xff]
    %v297 = vld [vmem:[#allocation5 + $0x1f0] sm:$0xff]
    %v298 = vld [vmem:[#allocation5 + $0x1f8] sm:$0xff]
    %v299 = vld [vmem:[%s4] sm:$0x1]
    %v301 = vlaneseq
    %v302 = vshrl.u32 %v301, 7
    %v303 = vsub.s32 0, %v302
    %v304 = vrot.slane %v299, %v303
    %306 = vmatprep.subr.mxu0 0.0
    %307 = vmatpush1.msra.mxu0 %v235
    %308 = vmatprep.subr.mxu0 0.0
    %309 = vmatpush1.msra.mxu0 %v236
    %310 = vmatprep.subr.mxu0 0.0
    %311 = vmatpush1.msra.mxu0 %v237
    %312 = vmatprep.subr.mxu0 0.0
    %313 = vmatpush1.msra.mxu0 %v238
    %314 = vmatprep.subr.mxu0 0.0
    %315 = vmatpush1.msra.mxu0 %v239
    %316 = vmatprep.subr.mxu0 0.0
    %317 = vmatpush1.msra.mxu0 %v240
    %318 = vmatprep.subr.mxu0 0.0
    %319 = vmatpush1.msra.mxu0 %v241
    %320 = vmatprep.subr.mxu0 0.0
    %321 = vmatpush1.msra.mxu0 %v242
    %322 = vmatprep.subr.mxu0 0.0
    %323 = vmatpush1.msra.mxu0 %v243
    %324 = vmatprep.subr.mxu0 0.0
    %325 = vmatpush1.msra.mxu0 %v244
    %326 = vmatprep.subr.mxu0 0.0
    %327 = vmatpush1.msra.mxu0 %v245
    %328 = vmatprep.subr.mxu0 0.0
    %329 = vmatpush1.msra.mxu0 %v246
    %330 = vmatprep.subr.mxu0 0.0
    %331 = vmatpush1.msra.mxu0 %v247
    %332 = vmatprep.subr.mxu0 0.0
    %333 = vmatpush1.msra.mxu0 %v248
    %334 = vmatprep.subr.mxu0 0.0
    %335 = vmatpush1.msra.mxu0 %v249
    %336 = vmatprep.subr.mxu0 0.0
    %337 = vmatpush1.msra.mxu0 %v250
    %338 = vmatprep.subr.mxu0 0.0
    %339 = vmatpush1.msra.mxu0 %v251
    %340 = vmatprep.subr.mxu0 0.0
    %341 = vmatpush1.msra.mxu0 %v252
    %342 = vmatprep.subr.mxu0 0.0
    %343 = vmatpush1.msra.mxu0 %v253
    %344 = vmatprep.subr.mxu0 0.0
    %345 = vmatpush1.msra.mxu0 %v254
    %346 = vmatprep.subr.mxu0 0.0
    %347 = vmatpush1.msra.mxu0 %v255
    %348 = vmatprep.subr.mxu0 0.0
    %349 = vmatpush1.msra.mxu0 %v256
    %350 = vmatprep.subr.mxu0 0.0
    %351 = vmatpush1.msra.mxu0 %v257
    %352 = vmatprep.subr.mxu0 0.0
    %353 = vmatpush1.msra.mxu0 %v258
    %354 = vmatprep.subr.mxu0 0.0
    %355 = vmatpush1.msra.mxu0 %v259
    %356 = vmatprep.subr.mxu0 0.0
    %357 = vmatpush1.msra.mxu0 %v260
    %358 = vmatprep.subr.mxu0 0.0
    %359 = vmatpush1.msra.mxu0 %v261
    %360 = vmatprep.subr.mxu0 0.0
    %361 = vmatpush1.msra.mxu0 %v262
    %362 = vmatprep.subr.mxu0 0.0
    %363 = vmatpush1.msra.mxu0 %v263
    %364 = vmatprep.subr.mxu0 0.0
    %365 = vmatpush1.msra.mxu0 %v264
    %366 = vmatprep.subr.mxu0 0.0
    %367 = vmatpush1.msra.mxu0 %v265
    %368 = vmatprep.subr.mxu0 0.0
    %369 = vmatpush1.msra.mxu0 %v266
    %370 = vmatprep.mubr.f32.mxu0 %v232
    %371 = vmatmul.mubr.f32.gmra.mrb[0].mxu0 %v231
    %v372 = vpop.f32.mrb[0].mxu0
    %v373 = vadd.f32 %v304, %v372
    %v374 = vpop.f32.mrb[0].mxu0
    %375 = vdwg.mxu0
    %376 = vmatprep.subr.mxu0 0.0
    %377 = vmatpush1.msra.mxu0 %v267
    %378 = vmatprep.subr.mxu0 0.0
    %379 = vmatpush1.msra.mxu0 %v268
    %380 = vmatprep.subr.mxu0 0.0
    %381 = vmatpush1.msra.mxu0 %v269
    %382 = vmatprep.subr.mxu0 0.0
    %383 = vmatpush1.msra.mxu0 %v270
    %384 = vmatprep.subr.mxu0 0.0
    %385 = vmatpush1.msra.mxu0 %v271
    %386 = vmatprep.subr.mxu0 0.0
    %387 = vmatpush1.msra.mxu0 %v272
    %388 = vmatprep.subr.mxu0 0.0
    %389 = vmatpush1.msra.mxu0 %v273
    %390 = vmatprep.subr.mxu0 0.0
    %391 = vmatpush1.msra.mxu0 %v274
    %392 = vmatprep.subr.mxu0 0.0
    %393 = vmatpush1.msra.mxu0 %v275
    %394 = vmatprep.subr.mxu0 0.0
    %395 = vmatpush1.msra.mxu0 %v276
    %396 = vmatprep.subr.mxu0 0.0
    %397 = vmatpush1.msra.mxu0 %v277
    %398 = vmatprep.subr.mxu0 0.0
    %399 = vmatpush1.msra.mxu0 %v278
    %400 = vmatprep.subr.mxu0 0.0
    %401 = vmatpush1.msra.mxu0 %v279
    %402 = vmatprep.subr.mxu0 0.0
    %403 = vmatpush1.msra.mxu0 %v280
    %404 = vmatprep.subr.mxu0 0.0
    %405 = vmatpush1.msra.mxu0 %v281
    %406 = vmatprep.subr.mxu0 0.0
    %407 = vmatpush1.msra.mxu0 %v282
    %408 = vmatprep.subr.mxu0 0.0
    %409 = vmatpush1.msra.mxu0 %v283
    %410 = vmatprep.subr.mxu0 0.0
    %411 = vmatpush1.msra.mxu0 %v284
    %412 = vmatprep.subr.mxu0 0.0
    %413 = vmatpush1.msra.mxu0 %v285
    %414 = vmatprep.subr.mxu0 0.0
    %415 = vmatpush1.msra.mxu0 %v286
    %416 = vmatprep.subr.mxu0 0.0
    %417 = vmatpush1.msra.mxu0 %v287
    %418 = vmatprep.subr.mxu0 0.0
    %419 = vmatpush1.msra.mxu0 %v288
    %420 = vmatprep.subr.mxu0 0.0
    %421 = vmatpush1.msra.mxu0 %v289
    %422 = vmatprep.subr.mxu0 0.0
    %423 = vmatpush1.msra.mxu0 %v290
    %424 = vmatprep.subr.mxu0 0.0
    %425 = vmatpush1.msra.mxu0 %v291
    %426 = vmatprep.subr.mxu0 0.0
    %427 = vmatpush1.msra.mxu0 %v292
    %428 = vmatprep.subr.mxu0 0.0
    %429 = vmatpush1.msra.mxu0 %v293
    %430 = vmatprep.subr.mxu0 0.0
    %431 = vmatpush1.msra.mxu0 %v294
    %432 = vmatprep.subr.mxu0 0.0
    %433 = vmatpush1.msra.mxu0 %v295
    %434 = vmatprep.subr.mxu0 0.0
    %435 = vmatpush1.msra.mxu0 %v296
    %436 = vmatprep.subr.mxu0 0.0
    %437 = vmatpush1.msra.mxu0 %v297
    %438 = vmatprep.subr.mxu0 0.0
    %439 = vmatpush1.msra.mxu0 %v298
    %440 = vmatprep.mubr.f32.mxu0 %v234
    %441 = vmatmul.mubr.f32.gmra.mrb[0].mxu0 %v233
    %v442 = vpop.f32.mrb[0].mxu0
    %v443 = vadd.f32 %v373, %v442
    %v444 = vpop.f32.mrb[0].mxu0
    %445 = vdwg.mxu0
    %v446 = vlaneseq
    %v447 = vand.u32 %v446, 127
    %vm448 = vcmp.lt.s32.totalorder %v447, 2
    %vm449 = vcmp.eq.s32.totalorder %v447, 2
    %v450 = vsel %vm448, %v443, -1e+30
    %451 = vmax.xlane.f32.xlu0 %v450
    %v452 = vpop.xlane.xlu0 %451
    %v453 = vsub.f32 %v450, %v452
    %v454 = vmul.f32 %v453, 1.442695
    %v455 = vpow.pop %v454
    %456 = vadd.xlane.f32.xlu0 %v455
    %v457 = vpop.xlane.xlu0 %456
    %v458 = vrcp.pop %v457
    %v459 = vmul.f32 1.0, %v458
    %v460 = vmul.f32 %v455, %v459
    %v461 = vsel %vm449, %v443, 0.0
    %v462 = vsel %vm448, %v460, %v461
    %463 = vst [vmem:[#allocation7] sm:$0xff] %v462
    // Predicated region
    $region30: #{tpu_custom_call.1} parent=1 // pred_check
      _
    $region31: #{tpu_custom_call.1} parent=1 // pred_check_branch
      %465 = sbr.rel (0) target = $region33
    $region32: #{tpu_custom_call.1} parent=1 // pred_region
      %s467 = ssub.s32 128, 128
      %468 = vsyncadd [#allocation4], %s467
      %s470 = sshll.u32 [#allocation7], 4
      %s471 = int_to_ptr.vmem [resolvable:$true] %s470
      %473 = dma.vmem_to_hbm [thread:$0]  %s471, 128, %s5, [#allocation4]
    $region33: #{tpu_custom_call.1} parent=1 // pred_fallthru
      _
    // Predicated region
    $region34: #{tpu_custom_call.1} parent=1 // pred_check
      _
    $region35: #{tpu_custom_call.1} parent=1 // pred_check_branch
      %475 = sbr.rel (0) target = $region37
    $region36: #{tpu_custom_call.1} parent=1 // pred_region
      %476 = dma.done [#allocation4], 128
    $region37: #{tpu_custom_call.1} parent=1 // pred_fallthru
      _
    %477 = vsyncpa [#allocation3], 1
    %478 = vsyncpa [#allocation6], 1
    %479 = vsyncpa [#allocation4], 1

</llo_original>
